<compile_context>
chip_gen: v7x
topology: tpu7x:2x2x1
jax: 0.10.0
libtpu: 0.0.40
codegen_flags: <defaults>
</compile_context>

<pallas_src>
import functools

import jax
import jax.numpy as jnp
from jax.experimental import pallas as pl
from jax.experimental.pallas import tpu as pltpu


def _mlp_kernel(x_ref, w1_ref, b1_ref, w2_ref, b2_ref, w3_ref, b3_ref, o_ref):
    # x_ref: [in_f, tile_n]  (batch on lanes).  Weights in PyTorch [out, in] layout.
    x = x_ref[...]                                                          # [2,  T]

    h1 = jnp.dot(w1_ref[...], x, preferred_element_type=jnp.float32) + b1_ref[...]
    h1 = jnp.maximum(h1, 0.0)                                               # [10, T]

    h2 = jnp.dot(w2_ref[...], h1, preferred_element_type=jnp.float32) + b2_ref[...]
    h2 = jnp.maximum(h2, 0.0)                                               # [10, T]

    out = jnp.dot(w3_ref[...], h2, preferred_element_type=jnp.float32) + b3_ref[...]
    o_ref[...] = out.astype(o_ref.dtype)                                    # [1,  T]


def _reference(x, w1, b1, w2, b2, w3, b3):
    # Pure-jnp reference (and small-batch fast path).  Weights are [out, in],
    # biases [out, 1], matching nn.Linear.
    h1 = jnp.maximum(x @ w1.T + b1.T, 0.0)
    h2 = jnp.maximum(h1 @ w2.T + b2.T, 0.0)
    return h2 @ w3.T + b3.T


@functools.partial(jax.jit, static_argnames=("tile_n", "min_pallas_batch"))
def circle_model_v2(x, w1, b1, w2, b2, w3, b3, *, tile_n=1024, min_pallas_batch=512):
    """Forward pass of CircleModelV2.

    x : [N, 2] float32
    w1: [10, 2], b1: [10, 1], w2: [10, 10], b2: [10, 1], w3: [1, 10], b3: [1, 1]
    returns [N, 1] float32 (raw logits, same as the PyTorch forward)
    """
    assert tile_n % 128 == 0, "tile_n must be a multiple of 128 (lane width)"
    n, in_f = x.shape
    h1_f = w1.shape[0]
    h2_f = w2.shape[0]
    out_f = w3.shape[0]

    # Tiny batches: Pallas launch + pipeline overhead exceeds the total work.
    if n < min_pallas_batch:
        return _reference(x, w1, b1, w2, b2, w3, b3)

    # Batch-on-lanes: transpose x to [in_f, N] and pad batch to a tile multiple.
    n_pad = ((n + tile_n - 1) // tile_n) * tile_n
    xt = x.T                                                   # [in_f, n]
    if n_pad != n:
        xt = jnp.pad(xt, ((0, 0), (0, n_pad - n)))

    grid = (n_pad // tile_n,)

    def full(shape):
        return pl.BlockSpec(shape, lambda i: (0,) * len(shape))

    flops = 2 * n_pad * (in_f * h1_f + h1_f * h2_f + h2_f * out_f)
    bytes_accessed = 4 * (
        n_pad * (in_f + out_f)
        + w1.size + b1.size + w2.size + b2.size + w3.size + b3.size
    )

    out_t = pl.pallas_call(
        _mlp_kernel,
        out_shape=jax.ShapeDtypeStruct((out_f, n_pad), jnp.float32),
        grid_spec=pltpu.PrefetchScalarGridSpec(
            num_scalar_prefetch=0,
            grid=grid,
            in_specs=[
                pl.BlockSpec((in_f, tile_n), lambda i: (0, i)),   # x tile (lane-dense)
                full((h1_f, in_f)),                               # w1 [10, 2]
                full((h1_f, 1)),                                  # b1 [10, 1]
                full((h2_f, h1_f)),                               # w2 [10, 10]
                full((h2_f, 1)),                                  # b2 [10, 1]
                full((out_f, h2_f)),                              # w3 [1, 10]
                full((out_f, 1)),                                 # b3 [1, 1]
            ],
            out_specs=pl.BlockSpec((out_f, tile_n), lambda i: (0, i)),
        ),
        compiler_params=pltpu.CompilerParams(
            dimension_semantics=("parallel",),   # shard batch tiles across TCs (v7x)
        ),
        cost_estimate=pl.CostEstimate(
            flops=flops, transcendentals=0, bytes_accessed=bytes_accessed),
    )(xt, w1, b1, w2, b2, w3, b3)

    # [1, n_pad] -> drop padding -> [n, 1]
    return out_t[:, :n].T


def _init_params(key):
    """Deterministic init mimicking nn.Linear's U(-1/sqrt(fan_in), 1/sqrt(fan_in)).

    Weights kept in PyTorch's [out, in] layout; biases as [out, 1].
    """
    def linear(k, fan_in, fan_out):
        kw, kb = jax.random.split(k)
        bound = 1.0 / jnp.sqrt(float(fan_in))
        w = jax.random.uniform(kw, (fan_out, fan_in), jnp.float32, -bound, bound)
        b = jax.random.uniform(kb, (fan_out, 1), jnp.float32, -bound, bound)
        return w, b

    k1, k2, k3 = jax.random.split(key, 3)
    w1, b1 = linear(k1, 2, 10)    # layer_1
    w2, b2 = linear(k2, 10, 10)   # layer_2
    w3, b3 = linear(k3, 10, 1)    # layer_3
    return w1, b1, w2, b2, w3, b3


if __name__ == "__main__":
    key = jax.random.PRNGKey(0)
    kx1, kx2, kx3, kp = jax.random.split(key, 4)
    params = _init_params(kp)

    # 1) Pallas path, batch a multiple of the tile (grid of 4 tiles at tile_n=512).
    N1 = 2048
    x1 = jax.random.normal(kx1, (N1, 2), dtype=jnp.float32)
    out1 = jax.block_until_ready(circle_model_v2(x1, *params, tile_n=512))
    ref1 = _reference(x1, *params)
    assert out1.shape == (N1, 1), out1.shape
    assert jnp.allclose(out1, ref1, atol=1e-5, rtol=1e-4), "mismatch (aligned batch)"

    # 2) Pallas path with a ragged batch (exercises zero-pad + slice-back).
    N2 = 2100
    x2 = jax.random.normal(kx2, (N2, 2), dtype=jnp.float32)
    out2 = jax.block_until_ready(circle_model_v2(x2, *params, tile_n=512))
    ref2 = _reference(x2, *params)
    assert out2.shape == (N2, 1), out2.shape
    assert jnp.allclose(out2, ref2, atol=1e-5, rtol=1e-4), "mismatch (ragged batch)"

    # 3) Tiny batch takes the plain-XLA fallback path.
    N3 = 16
    x3 = jax.random.normal(kx3, (N3, 2), dtype=jnp.float32)
    out3 = jax.block_until_ready(circle_model_v2(x3, *params))
    ref3 = _reference(x3, *params)
    assert out3.shape == (N3, 1), out3.shape
    assert jnp.allclose(out3, ref3, atol=1e-5, rtol=1e-4), "mismatch (tiny batch)"

    print("KERNEL_OK")
</pallas_src>

<mosaic_0001>
module attributes {stable_mosaic.version = 11 : i64} {
  func.func @_mlp_kernel(%arg0: i32, %arg1: memref<2x512xf32, #tpu.memory_space<vmem>>, %arg2: memref<10x2xf32, #tpu.memory_space<vmem>>, %arg3: memref<10x1xf32, #tpu.memory_space<vmem>>, %arg4: memref<10x10xf32, #tpu.memory_space<vmem>>, %arg5: memref<10x1xf32, #tpu.memory_space<vmem>>, %arg6: memref<1x10xf32, #tpu.memory_space<vmem>>, %arg7: memref<1x1xf32, #tpu.memory_space<vmem>>, %arg8: memref<1x512xf32, #tpu.memory_space<vmem>>) attributes {dimension_semantics = [#tpu.dimension_semantics<parallel>], iteration_bounds = array<i64: 4>, scalar_prefetch = 0 : i64, scratch_operands = 0 : i64, tpu.core_type = #tpu.core_type<tc>, window_params = [{transform_indices = @transform_0, window_bounds = array<i64: 2, 512>}, {pipeline_mode = #tpu.pipeline_mode<synchronous>, transform_indices = @transform_1, window_bounds = array<i64: 10, 2>}, {pipeline_mode = #tpu.pipeline_mode<synchronous>, transform_indices = @transform_2, window_bounds = array<i64: 10, 1>}, {pipeline_mode = #tpu.pipeline_mode<synchronous>, transform_indices = @transform_3, window_bounds = array<i64: 10, 10>}, {pipeline_mode = #tpu.pipeline_mode<synchronous>, transform_indices = @transform_4, window_bounds = array<i64: 10, 1>}, {pipeline_mode = #tpu.pipeline_mode<synchronous>, transform_indices = @transform_5, window_bounds = array<i64: 1, 10>}, {pipeline_mode = #tpu.pipeline_mode<synchronous>, transform_indices = @transform_6, window_bounds = array<i64: 1, 1>}, {transform_indices = @transform_7, window_bounds = array<i64: 1, 512>}]} {
    %c0 = arith.constant 0 : index
    %c0_0 = arith.constant 0 : index
    %0 = vector.load %arg1[%c0, %c0_0] : memref<2x512xf32, #tpu.memory_space<vmem>>, vector<2x512xf32>
    %c0_1 = arith.constant 0 : index
    %c0_2 = arith.constant 0 : index
    %1 = vector.load %arg2[%c0_1, %c0_2] : memref<10x2xf32, #tpu.memory_space<vmem>>, vector<10x2xf32>
    %cst = arith.constant dense<0.000000e+00> : vector<10x512xf32>
    %2 = tpu.matmul %1, %0, %cst {dimension_numbers = #tpu.dot_dimension_numbers<[1], [0], [0], [1], [0, 0, 1, 1], [], []>} : vector<10x2xf32>, vector<2x512xf32>, vector<10x512xf32> -> vector<10x512xf32>
    %c0_3 = arith.constant 0 : index
    %c0_4 = arith.constant 0 : index
    %3 = vector.load %arg3[%c0_3, %c0_4] : memref<10x1xf32, #tpu.memory_space<vmem>>, vector<10x1xf32>
    %4 = vector.broadcast %3 : vector<10x1xf32> to vector<10x512xf32>
    %5 = arith.addf %2, %4 : vector<10x512xf32>
    %cst_5 = arith.constant 0.000000e+00 : f32
    %6 = vector.broadcast %cst_5 : f32 to vector<10x512xf32>
    %7 = arith.maximumf %5, %6 : vector<10x512xf32>
    %c0_6 = arith.constant 0 : index
    %c0_7 = arith.constant 0 : index
    %8 = vector.load %arg4[%c0_6, %c0_7] : memref<10x10xf32, #tpu.memory_space<vmem>>, vector<10x10xf32>
    %cst_8 = arith.constant dense<0.000000e+00> : vector<10x512xf32>
    %9 = tpu.matmul %8, %7, %cst_8 {dimension_numbers = #tpu.dot_dimension_numbers<[1], [0], [0], [1], [0, 0, 1, 1], [], []>} : vector<10x10xf32>, vector<10x512xf32>, vector<10x512xf32> -> vector<10x512xf32>
    %c0_9 = arith.constant 0 : index
    %c0_10 = arith.constant 0 : index
    %10 = vector.load %arg5[%c0_9, %c0_10] : memref<10x1xf32, #tpu.memory_space<vmem>>, vector<10x1xf32>
    %11 = vector.broadcast %10 : vector<10x1xf32> to vector<10x512xf32>
    %12 = arith.addf %9, %11 : vector<10x512xf32>
    %cst_11 = arith.constant 0.000000e+00 : f32
    %13 = vector.broadcast %cst_11 : f32 to vector<10x512xf32>
    %14 = arith.maximumf %12, %13 : vector<10x512xf32>
    %c0_12 = arith.constant 0 : index
    %c0_13 = arith.constant 0 : index
    %15 = vector.load %arg6[%c0_12, %c0_13] : memref<1x10xf32, #tpu.memory_space<vmem>>, vector<1x10xf32>
    %cst_14 = arith.constant dense<0.000000e+00> : vector<1x512xf32>
    %16 = tpu.matmul %15, %14, %cst_14 {dimension_numbers = #tpu.dot_dimension_numbers<[1], [0], [0], [1], [0, 0, 1, 1], [], []>} : vector<1x10xf32>, vector<10x512xf32>, vector<1x512xf32> -> vector<1x512xf32>
    %c0_15 = arith.constant 0 : index
    %c0_16 = arith.constant 0 : index
    %17 = vector.load %arg7[%c0_15, %c0_16] : memref<1x1xf32, #tpu.memory_space<vmem>>, vector<1x1xf32>
    %18 = vector.broadcast %17 : vector<1x1xf32> to vector<1x512xf32>
    %19 = arith.addf %16, %18 : vector<1x512xf32>
    %c0_17 = arith.constant 0 : index
    %c0_18 = arith.constant 0 : index
    %20 = vector.load %arg8[%c0_17, %c0_18] : memref<1x512xf32, #tpu.memory_space<vmem>>, vector<1x512xf32>
    tpu.vector_store %arg8[%c0_17, %c0_18], %19 {strides = array<i32>} : memref<1x512xf32, #tpu.memory_space<vmem>>, vector<1x512xf32>,
    return
  }
  func.func @transform_0(%arg0: i32) -> (i32, i32) {
    %c0_i32 = arith.constant 0 : i32
    %c0_i32_0 = arith.constant 0 : i32
    return %c0_i32, %arg0 : i32, i32
  }
  func.func @transform_1(%arg0: i32) -> (i32, i32) {
    %c0_i32 = arith.constant 0 : i32
    %c0_i32_0 = arith.constant 0 : i32
    %c0_i32_1 = arith.constant 0 : i32
    return %c0_i32, %c0_i32_0 : i32, i32
  }
  func.func @transform_2(%arg0: i32) -> (i32, i32) {
    %c0_i32 = arith.constant 0 : i32
    %c0_i32_0 = arith.constant 0 : i32
    %c0_i32_1 = arith.constant 0 : i32
    return %c0_i32, %c0_i32_0 : i32, i32
  }
  func.func @transform_3(%arg0: i32) -> (i32, i32) {
    %c0_i32 = arith.constant 0 : i32
    %c0_i32_0 = arith.constant 0 : i32
    %c0_i32_1 = arith.constant 0 : i32
    return %c0_i32, %c0_i32_0 : i32, i32
  }
  func.func @transform_4(%arg0: i32) -> (i32, i32) {
    %c0_i32 = arith.constant 0 : i32
    %c0_i32_0 = arith.constant 0 : i32
    %c0_i32_1 = arith.constant 0 : i32
    return %c0_i32, %c0_i32_0 : i32, i32
  }
  func.func @transform_5(%arg0: i32) -> (i32, i32) {
    %c0_i32 = arith.constant 0 : i32
    %c0_i32_0 = arith.constant 0 : i32
    %c0_i32_1 = arith.constant 0 : i32
    return %c0_i32, %c0_i32_0 : i32, i32
  }
  func.func @transform_6(%arg0: i32) -> (i32, i32) {
    %c0_i32 = arith.constant 0 : i32
    %c0_i32_0 = arith.constant 0 : i32
    %c0_i32_1 = arith.constant 0 : i32
    return %c0_i32, %c0_i32_0 : i32, i32
  }
  func.func @transform_7(%arg0: i32) -> (i32, i32) {
    %c0_i32 = arith.constant 0 : i32
    %c0_i32_0 = arith.constant 0 : i32
    return %c0_i32, %arg0 : i32, i32
  }
}

</mosaic_0001>

<llo_original>
// kernel: circle_model_v2.1
$region0: #{circle_model_v2.1}
  #allocation0 [shape = 'u32[]', space=smem, size = 0x4, offset = 0x4, fixed_abs, tag = 'smem constant byte address 0x4 - core index']
  #allocation1 [shape = 'u32[144,128]{1,0:T(1,128)}', space=vmem, size = 0x12000, scoped, tag = 'internal scratch']
  #allocation2 [shape = 'f32[1,1]{1,0:T(1,128)S(1)}', space=vmem, size = 0x200, scoped, tag = 'scoped memory for circle_model_v2.1']
  %s0 = inlined_call_operand.vmem [shape: f32[2,2048], index: 0, kind: input, shape index: {}]
  %s1 = inlined_call_operand.vmem [shape: f32[10,2], index: 1, kind: input, shape index: {}]
  %s2 = inlined_call_operand.vmem [shape: f32[10,1], index: 2, kind: input, shape index: {}]
  %s3 = inlined_call_operand.vmem [shape: f32[10,10], index: 3, kind: input, shape index: {}]
  %s4 = inlined_call_operand.vmem [shape: f32[10,1], index: 4, kind: input, shape index: {}]
  %s5 = inlined_call_operand.vmem [shape: f32[1,10], index: 5, kind: input, shape index: {}]
  %s6 = inlined_call_operand.<no memory space> [shape: f32[1,1], index: 6, kind: input, shape index: {}]
  %s7 = inlined_call_operand.hbm [shape: f32[1,2048], index: 7, kind: output, shape index: {}]
  %s8 = sld [smem:[#allocation0]]
  $region61: #{circle_model_v2.1} parent=0
    _
  %s10 = ssub.s32 1, %s8
  %s11 = scalar_select 0, %s10, %s8
  %v12 = vstv %s6
  %13 = vst [vmem:[#allocation2] sm:$0x1] %v12
  $region1: #{circle_model_v2.1} parent=0
    #allocation3 [shape = 'u8[4096]{0}', space=vmem, size = 0x1000, scoped, tag = 'output window, operand 0']
    #allocation4 [shape = 's32[2]{0}', space=sflag, size = 0x8, scoped, tag = 'scoped memory for circle_model_v2.1']
    %14 = vsyncpa [#allocation4], 0
    %s15 = scalar_lea.sflag [#allocation4], 1
    %16 = vsyncpa %s15, 0
    loop: start=0, step=1, limit=6
    $region2: #{circle_model_v2.1} parent=1 // loop_pre_header
      _
    $region3: #{circle_model_v2.1} parent=1 // loop_header
      %s18 = sphi 0, %s22
      %p19 = scmp.ge.s32.totalorder %s18, 6
      %s28 = sphi 0, %s30
      %s31 = sphi 0, %s28
      %s32 = sphi 0, %s31
      %s48 = sphi 0, %s32
      %s52 = sphi 0, %s52
      %s54 = sphi 0, %s52
      %s55 = sphi 0, %s54
      %s69 = sphi 0, %s55
      %s73 = sphi 0, %s73
      %s75 = sphi 0, %s73
      %s76 = sphi 0, %s75
      %s90 = sphi 0, %s76
      %s94 = sphi 0, %s94
      %s96 = sphi 0, %s94
      %s97 = sphi 0, %s96
      %s111 = sphi 0, %s97
      %s115 = sphi 0, %s115
      %s117 = sphi 0, %s115
      %s118 = sphi 0, %s117
      %s132 = sphi 0, %s118
      %s136 = sphi 0, %s136
      %s138 = sphi 0, %s136
      %s139 = sphi 0, %s138
      %s153 = sphi 0, %s139
      %s157 = sphi 0, %s157
      %s159 = sphi 0, %s157
      %s160 = sphi 0, %s159
      %s174 = sphi 0, %s160
      %s180 = sphi 0, %s182
      %s183 = sphi 0, %s180
      %s184 = sphi 0, %s183
      %s200 = sphi 0, %s184
    $region4: #{circle_model_v2.1} parent=1 // loop_header_branch
      %21 = sbr.rel (%p19) target = $region8
    $region5: #{circle_model_v2.1} parent=1 // loop_body
      %s23 = ssub.s32 %s18, 1
      %s24 = ssub.s32 %s18, 2
      %s25 = sadd.s32 %s18, 1
      %s26 = ssub.s32 %s18, %s25
      %p27 = scmp.eq.s32.totalorder %s26, 0
      %s29 = sadd.s32 %s28, 1
      %s30 = scalar_select %p27, %s28, %s29
      %p33 = pneg %p27
      %p34 = scmp.eq.s32.totalorder %s18, 3
      %p35 = por %p33, %p34
      %p36 = scmp.ne.s32.totalorder %s28, %s31
      %p37 = scmp.eq.s32.totalorder %s18, 0
      %p38 = por %p36, %p37
      %p39 = scmp.ne.s32.totalorder %s28, %s31
      %p40 = scmp.eq.s32.totalorder %s23, 3
      %p41 = por %p39, %p40
      %p42 = scmp.ne.s32.totalorder %s31, %s32
      %p43 = scmp.eq.s32.totalorder %s23, 0
      %p44 = por %p42, %p43
      %p45 = scmp.ne.s32.totalorder %s31, %s32
      %p46 = scmp.eq.s32.totalorder %s24, 3
      %p47 = por %p45, %p46
      %p49 = scmp.ne.s32.totalorder %s32, %s48
      %p50 = scmp.eq.s32.totalorder %s24, 0
      %p51 = por %p49, %p50
      %s53 = sadd.s32 %s52, 1
      %p56 = scmp.eq.s32.totalorder %s18, 3
      %p57 = scmp.ne.s32.totalorder %s52, %s54
      %p58 = scmp.eq.s32.totalorder %s18, 0
      %p59 = por %p57, %p58
      %p60 = scmp.ne.s32.totalorder %s52, %s54
      %p61 = scmp.eq.s32.totalorder %s23, 3
      %p62 = por %p60, %p61
      %p63 = scmp.ne.s32.totalorder %s54, %s55
      %p64 = scmp.eq.s32.totalorder %s23, 0
      %p65 = por %p63, %p64
      %p66 = scmp.ne.s32.totalorder %s54, %s55
      %p67 = scmp.eq.s32.totalorder %s24, 3
      %p68 = por %p66, %p67
      %p70 = scmp.ne.s32.totalorder %s55, %s69
      %p71 = scmp.eq.s32.totalorder %s24, 0
      %p72 = por %p70, %p71
      %s74 = sadd.s32 %s73, 1
      %p77 = scmp.eq.s32.totalorder %s18, 3
      %p78 = scmp.ne.s32.totalorder %s73, %s75
      %p79 = scmp.eq.s32.totalorder %s18, 0
      %p80 = por %p78, %p79
      %p81 = scmp.ne.s32.totalorder %s73, %s75
      %p82 = scmp.eq.s32.totalorder %s23, 3
      %p83 = por %p81, %p82
      %p84 = scmp.ne.s32.totalorder %s75, %s76
      %p85 = scmp.eq.s32.totalorder %s23, 0
      %p86 = por %p84, %p85
      %p87 = scmp.ne.s32.totalorder %s75, %s76
      %p88 = scmp.eq.s32.totalorder %s24, 3
      %p89 = por %p87, %p88
      %p91 = scmp.ne.s32.totalorder %s76, %s90
      %p92 = scmp.eq.s32.totalorder %s24, 0
      %p93 = por %p91, %p92
      %s95 = sadd.s32 %s94, 1
      %p98 = scmp.eq.s32.totalorder %s18, 3
      %p99 = scmp.ne.s32.totalorder %s94, %s96
      %p100 = scmp.eq.s32.totalorder %s18, 0
      %p101 = por %p99, %p100
      %p102 = scmp.ne.s32.totalorder %s94, %s96
      %p103 = scmp.eq.s32.totalorder %s23, 3
      %p104 = por %p102, %p103
      %p105 = scmp.ne.s32.totalorder %s96, %s97
      %p106 = scmp.eq.s32.totalorder %s23, 0
      %p107 = por %p105, %p106
      %p108 = scmp.ne.s32.totalorder %s96, %s97
      %p109 = scmp.eq.s32.totalorder %s24, 3
      %p110 = por %p108, %p109
      %p112 = scmp.ne.s32.totalorder %s97, %s111
      %p113 = scmp.eq.s32.totalorder %s24, 0
      %p114 = por %p112, %p113
      %s116 = sadd.s32 %s115, 1
      %p119 = scmp.eq.s32.totalorder %s18, 3
      %p120 = scmp.ne.s32.totalorder %s115, %s117
      %p121 = scmp.eq.s32.totalorder %s18, 0
      %p122 = por %p120, %p121
      %p123 = scmp.ne.s32.totalorder %s115, %s117
      %p124 = scmp.eq.s32.totalorder %s23, 3
      %p125 = por %p123, %p124
      %p126 = scmp.ne.s32.totalorder %s117, %s118
      %p127 = scmp.eq.s32.totalorder %s23, 0
      %p128 = por %p126, %p127
      %p129 = scmp.ne.s32.totalorder %s117, %s118
      %p130 = scmp.eq.s32.totalorder %s24, 3
      %p131 = por %p129, %p130
      %p133 = scmp.ne.s32.totalorder %s118, %s132
      %p134 = scmp.eq.s32.totalorder %s24, 0
      %p135 = por %p133, %p134
      %s137 = sadd.s32 %s136, 1
      %p140 = scmp.eq.s32.totalorder %s18, 3
      %p141 = scmp.ne.s32.totalorder %s136, %s138
      %p142 = scmp.eq.s32.totalorder %s18, 0
      %p143 = por %p141, %p142
      %p144 = scmp.ne.s32.totalorder %s136, %s138
      %p145 = scmp.eq.s32.totalorder %s23, 3
      %p146 = por %p144, %p145
      %p147 = scmp.ne.s32.totalorder %s138, %s139
      %p148 = scmp.eq.s32.totalorder %s23, 0
      %p149 = por %p147, %p148
      %p150 = scmp.ne.s32.totalorder %s138, %s139
      %p151 = scmp.eq.s32.totalorder %s24, 3
      %p152 = por %p150, %p151
      %p154 = scmp.ne.s32.totalorder %s139, %s153
      %p155 = scmp.eq.s32.totalorder %s24, 0
      %p156 = por %p154, %p155
      %s158 = sadd.s32 %s157, 1
      %p161 = scmp.eq.s32.totalorder %s18, 3
      %p162 = scmp.ne.s32.totalorder %s157, %s159
      %p163 = scmp.eq.s32.totalorder %s18, 0
      %p164 = por %p162, %p163
      %p165 = scmp.ne.s32.totalorder %s157, %s159
      %p166 = scmp.eq.s32.totalorder %s23, 3
      %p167 = por %p165, %p166
      %p168 = scmp.ne.s32.totalorder %s159, %s160
      %p169 = scmp.eq.s32.totalorder %s23, 0
      %p170 = por %p168, %p169
      %p171 = scmp.ne.s32.totalorder %s159, %s160
      %p172 = scmp.eq.s32.totalorder %s24, 3
      %p173 = por %p171, %p172
      %p175 = scmp.ne.s32.totalorder %s160, %s174
      %p176 = scmp.eq.s32.totalorder %s24, 0
      %p177 = por %p175, %p176
      %s178 = ssub.s32 %s18, %s25
      %p179 = scmp.eq.s32.totalorder %s178, 0
      %s181 = sadd.s32 %s180, 1
      %s182 = scalar_select %p179, %s180, %s181
      %p185 = pneg %p179
      %p186 = scmp.eq.s32.totalorder %s18, 3
      %p187 = por %p185, %p186
      %p188 = scmp.ne.s32.totalorder %s180, %s183
      %p189 = scmp.eq.s32.totalorder %s18, 0
      %p190 = por %p188, %p189
      %p191 = scmp.ne.s32.totalorder %s180, %s183
      %p192 = scmp.eq.s32.totalorder %s23, 3
      %p193 = por %p191, %p192
      %p194 = scmp.ne.s32.totalorder %s183, %s184
      %p195 = scmp.eq.s32.totalorder %s23, 0
      %p196 = por %p194, %p195
      %p197 = scmp.ne.s32.totalorder %s183, %s184
      %p198 = scmp.eq.s32.totalorder %s24, 3
      %p199 = por %p197, %p198
      %p201 = scmp.ne.s32.totalorder %s184, %s200
      %p202 = scmp.eq.s32.totalorder %s24, 0
      %p203 = por %p201, %p202
      %p204 = scmp.le.s32.totalorder 1, %s18
      %p205 = scmp.lt.s32.totalorder %s18, 5
      %p206 = pnand %p204, %p205
      %p207 = pneg %p206
      // Predicated region
      $region9: #{circle_model_v2.1} parent=5 // pred_check
        _
      $region10: #{circle_model_v2.1} parent=5 // pred_check_branch
        %209 = sbr.rel (%p206) target = $region12
      $region11: #{circle_model_v2.1} parent=5 // pred_region
        %s210 = ssub.s32 %s18, 1
        // Predicated region
        $region13: #{circle_model_v2.1} parent=11 // pred_check
          %p211 = pneg %p65
        $region14: #{circle_model_v2.1} parent=11 // pred_check_branch
          %213 = sbr.rel (%p211) target = $region16
        $region15: #{circle_model_v2.1} parent=11 // pred_region
          _
        $region16: #{circle_model_v2.1} parent=11 // pred_fallthru
          _
        // Predicated region
        $region17: #{circle_model_v2.1} parent=11 // pred_check
          %p214 = pneg %p86
        $region18: #{circle_model_v2.1} parent=11 // pred_check_branch
          %216 = sbr.rel (%p214) target = $region20
        $region19: #{circle_model_v2.1} parent=11 // pred_region
          _
        $region20: #{circle_model_v2.1} parent=11 // pred_fallthru
          _
        // Predicated region
        $region21: #{circle_model_v2.1} parent=11 // pred_check
          %p217 = pneg %p107
        $region22: #{circle_model_v2.1} parent=11 // pred_check_branch
          %219 = sbr.rel (%p217) target = $region24
        $region23: #{circle_model_v2.1} parent=11 // pred_region
          _
        $region24: #{circle_model_v2.1} parent=11 // pred_fallthru
          _
        // Predicated region
        $region25: #{circle_model_v2.1} parent=11 // pred_check
          %p220 = pneg %p128
        $region26: #{circle_model_v2.1} parent=11 // pred_check_branch
          %222 = sbr.rel (%p220) target = $region28
        $region27: #{circle_model_v2.1} parent=11 // pred_region
          _
        $region28: #{circle_model_v2.1} parent=11 // pred_fallthru
          _
        // Predicated region
        $region29: #{circle_model_v2.1} parent=11 // pred_check
          %p223 = pneg %p149
        $region30: #{circle_model_v2.1} parent=11 // pred_check_branch
          %225 = sbr.rel (%p223) target = $region32
        $region31: #{circle_model_v2.1} parent=11 // pred_region
          _
        $region32: #{circle_model_v2.1} parent=11 // pred_fallthru
          _
        // Predicated region
        $region33: #{circle_model_v2.1} parent=11 // pred_check
          %p226 = pneg %p170
        $region34: #{circle_model_v2.1} parent=11 // pred_check_branch
          %228 = sbr.rel (%p226) target = $region36
        $region35: #{circle_model_v2.1} parent=11 // pred_region
          _
        $region36: #{circle_model_v2.1} parent=11 // pred_fallthru
          _
      $region12: #{circle_model_v2.1} parent=5 // pred_fallthru
        _
      %p229 = scmp.lt.s32.totalorder %s18, 4
      // Predicated region
      $region37: #{circle_model_v2.1} parent=5 // pred_check
        %p230 = pneg %p229
      $region38: #{circle_model_v2.1} parent=5 // pred_check_branch
        %232 = sbr.rel (%p230) target = $region40
      $region39: #{circle_model_v2.1} parent=5 // pred_region
        // Predicated region
        $region41: #{circle_model_v2.1} parent=39 // pred_check
          %p233 = pneg %p38
        $region42: #{circle_model_v2.1} parent=39 // pred_check_branch
          %235 = sbr.rel (%p233) target = $region44
        $region43: #{circle_model_v2.1} parent=39 // pred_region
          %s236 = smul.u32 4, %s18
          %p237 = scmp.lt.s32.totalorder %s236, 15
          %s238 = scalar_select %p237, %s236, 15
          %s239 = smul.addr %s238, 2
          %s240 = scalar_lea.vmem %s0, %s239
          %s241 = smul.u32 4, %s18
        $region44: #{circle_model_v2.1} parent=39 // pred_fallthru
          _
      $region40: #{circle_model_v2.1} parent=5 // pred_fallthru
        _
      %p242 = scmp.le.s32.totalorder 1, %s18
      %p243 = scmp.lt.s32.totalorder %s18, 5
      %p244 = pnand %p242, %p243
      %p245 = pneg %p244
      // Predicated region
      $region45: #{circle_model_v2.1} parent=5 // pred_check
        _
      $region46: #{circle_model_v2.1} parent=5 // pred_check_branch
        %247 = sbr.rel (%p244) target = $region48
      $region47: #{circle_model_v2.1} parent=5 // pred_region
        %s248 = ssub.s32 %s18, 1
        %s249 = smul.u32 4, %s23
        %p250 = scmp.lt.s32.totalorder %s249, 15
        %s251 = scalar_select %p250, %s249, 15
        %s252 = smul.addr %s251, 2
        %s253 = scalar_lea.vmem %s0, %s252
        %p254 = pneg %p44
        %p255 = pneg %p41
        %p256 = pneg %p65
        %p257 = pneg %p62
        %p258 = pneg %p86
        %p259 = pneg %p83
        %p260 = pneg %p107
        %p261 = pneg %p104
        %p262 = pneg %p128
        %p263 = pneg %p125
        %p264 = pneg %p149
        %p265 = pneg %p146
        %p266 = pneg %p170
        %p267 = pneg %p167
        %p268 = pneg %p196
        %p269 = pneg %p193
        %s270 = sand.u32 %s183, 1
        %s271 = scalar_lea.sflag [#allocation4], %s270
        %s272 = sand.u32 %s183, 1
        %s273 = smul.addr %s272, 4
        %s274 = scalar_lea.vmem [#allocation3], %s273
        %s275 = smul.u32 4, %s23
        %p276 = scmp.lt.s32.totalorder %s275, 15
        %s277 = scalar_select %p276, %s275, 15
        %s278 = smul.addr %s277, 2
        %s279 = scalar_lea.vmem %s0, %s278
        %s280 = smul.u32 4, %s23
        %s281 = smul.u32 4, %s23
        %v282 = vld [vmem:[%s279] sm:$0xff]
        %v283 = vld [vmem:[%s1] sm:$0xff]
        %v284 = vld [vmem:[%s1 + $0x8] sm:$0x3]
        %v285 = vld [vmem:[%s2] sm:$0xff]
        %v286 = vld [vmem:[%s2 + $0x8] sm:$0x3]
        %288 = vset.pattern.permute.xlu0 0
        %289 = vperm.xlu0 %288, %v285
        %v290 = vpop.permute.xlu0 %289
        %293 = vset.pattern.permute.xlu0 0
        %294 = vperm.xlu0 %293, %v286
        %v295 = vpop.permute.xlu0 %294
        %v298 = vcombine.high %v282, %v282
        %v300 = vunpack.c.l.s4 1983009808
        %v301 = vunpack.c.0.s8 %v300
        %v302 = vlaneseq
        %v303 = vshrl.u32 %v302, 7
        %v304 = vsub.s32 %v301, %v303
        %v305 = vrot.slane %v282, %v304
        %v307 = vunpack.c.l.s4 1983009808
        %v308 = vunpack.c.0.s8 %v307
        %v309 = vlaneseq
        %v310 = vshrl.u32 %v309, 7
        %v311 = vsub.s32 %v308, %v310
        %v312 = vrot.slane %v298, %v311
        %v313 = vcombine.high %v305, %v305
        %v314 = vcombine.high %v312, %v312
        %vm315 = vcmask 15360
        %v317 = vsel %vm315, %v283, 0
        %v320 = vsel %vm315, %v284, 0
        %vm322 = vcmask 1041408
        %v323 = vsel %vm322, %v305, 0
        %v325 = vsel %vm322, %v313, 0
        %v327 = vsel %vm322, %v312, 0
        %v329 = vsel %vm322, %v314, 0
        %331 = vmatprep.subr.mxu0 %v325
        %332 = vmatpush1.msra.mxu0 %v323
        %333 = vmatprep.subr.mxu0 0.0
        %334 = vmatpush1.msra.mxu0 0.0
        %335 = vmatprep.subr.mxu0 0.0
        %336 = vmatpush1.msra.mxu0 0.0
        %337 = vmatprep.subr.mxu0 0.0
        %338 = vmatpush1.msra.mxu0 0.0
        %339 = vmatprep.subr.mxu0 0.0
        %340 = vmatpush1.msra.mxu0 0.0
        %341 = vmatprep.subr.mxu0 0.0
        %342 = vmatpush1.msra.mxu0 0.0
        %343 = vmatprep.subr.mxu0 0.0
        %344 = vmatpush1.msra.mxu0 0.0
        %345 = vmatprep.subr.mxu0 0.0
        %346 = vmatpush1.msra.mxu0 0.0
        %347 = vmatprep.subr.mxu0 0.0
        %348 = vmatpush1.msra.mxu0 0.0
        %349 = vmatprep.subr.mxu0 0.0
        %350 = vmatpush1.msra.mxu0 0.0
        %351 = vmatprep.subr.mxu0 0.0
        %352 = vmatpush1.msra.mxu0 0.0
        %353 = vmatprep.subr.mxu0 0.0
        %354 = vmatpush1.msra.mxu0 0.0
        %355 = vmatprep.subr.mxu0 0.0
        %356 = vmatpush1.msra.mxu0 0.0
        %357 = vmatprep.subr.mxu0 0.0
        %358 = vmatpush1.msra.mxu0 0.0
        %359 = vmatprep.subr.mxu0 0.0
        %360 = vmatpush1.msra.mxu0 0.0
        %361 = vmatprep.subr.mxu0 0.0
        %362 = vmatpush1.msra.mxu0 0.0
        %363 = vmatprep.subr.mxu0 0.0
        %364 = vmatpush1.msra.mxu0 0.0
        %365 = vmatprep.subr.mxu0 0.0
        %366 = vmatpush1.msra.mxu0 0.0
        %367 = vmatprep.subr.mxu0 0.0
        %368 = vmatpush1.msra.mxu0 0.0
        %369 = vmatprep.subr.mxu0 0.0
        %370 = vmatpush1.msra.mxu0 0.0
        %371 = vmatprep.subr.mxu0 0.0
        %372 = vmatpush1.msra.mxu0 0.0
        %373 = vmatprep.subr.mxu0 0.0
        %374 = vmatpush1.msra.mxu0 0.0
        %375 = vmatprep.subr.mxu0 0.0
        %376 = vmatpush1.msra.mxu0 0.0
        %377 = vmatprep.subr.mxu0 0.0
        %378 = vmatpush1.msra.mxu0 0.0
        %379 = vmatprep.subr.mxu0 0.0
        %380 = vmatpush1.msra.mxu0 0.0
        %381 = vmatprep.subr.mxu0 0.0
        %382 = vmatpush1.msra.mxu0 0.0
        %383 = vmatprep.subr.mxu0 0.0
        %384 = vmatpush1.msra.mxu0 0.0
        %385 = vmatprep.subr.mxu0 0.0
        %386 = vmatpush1.msra.mxu0 0.0
        %387 = vmatprep.subr.mxu0 0.0
        %388 = vmatpush1.msra.mxu0 0.0
        %389 = vmatprep.subr.mxu0 0.0
        %390 = vmatpush1.msra.mxu0 0.0
        %391 = vmatprep.subr.mxu0 0.0
        %392 = vmatpush1.msra.mxu0 0.0
        %393 = vmatprep.subr.mxu0 0.0
        %394 = vmatpush1.msra.mxu0 0.0
        %395 = vmatprep.mubr.f32.mxu0 0.0
        %396 = vmatmul.mubr.f32.gmra.mrb[0].mxu0 %v317
        %v397 = vpop.f32.mrb[0].mxu0
        %v398 = vadd.f32 %v290, %v397
        %v399 = vpop.f32.mrb[0].mxu0
        %v400 = vadd.f32 %v290, %v399
        %401 = vmatprep.mubr.f32.mxu0 0.0
        %402 = vmatmul.mubr.f32.gmra.mrb[0].mxu0 %v320
        %v403 = vpop.f32.mrb[0].mxu0
        %v404 = vadd.f32 %v295, %v403
        %v405 = vpop.f32.mrb[0].mxu0
        %v406 = vadd.f32 %v295, %v405
        %407 = vdwg.mxu0
        %408 = vmatprep.subr.mxu0 %v329
        %409 = vmatpush1.msra.mxu0 %v327
        %410 = vmatprep.subr.mxu0 0.0
        %411 = vmatpush1.msra.mxu0 0.0
        %412 = vmatprep.subr.mxu0 0.0
        %413 = vmatpush1.msra.mxu0 0.0
        %414 = vmatprep.subr.mxu0 0.0
        %415 = vmatpush1.msra.mxu0 0.0
        %416 = vmatprep.subr.mxu0 0.0
        %417 = vmatpush1.msra.mxu0 0.0
        %418 = vmatprep.subr.mxu0 0.0
        %419 = vmatpush1.msra.mxu0 0.0
        %420 = vmatprep.subr.mxu0 0.0
        %421 = vmatpush1.msra.mxu0 0.0
        %422 = vmatprep.subr.mxu0 0.0
        %423 = vmatpush1.msra.mxu0 0.0
        %424 = vmatprep.subr.mxu0 0.0
        %425 = vmatpush1.msra.mxu0 0.0
        %426 = vmatprep.subr.mxu0 0.0
        %427 = vmatpush1.msra.mxu0 0.0
        %428 = vmatprep.subr.mxu0 0.0
        %429 = vmatpush1.msra.mxu0 0.0
        %430 = vmatprep.subr.mxu0 0.0
        %431 = vmatpush1.msra.mxu0 0.0
        %432 = vmatprep.subr.mxu0 0.0
        %433 = vmatpush1.msra.mxu0 0.0
        %434 = vmatprep.subr.mxu0 0.0
        %435 = vmatpush1.msra.mxu0 0.0
        %436 = vmatprep.subr.mxu0 0.0
        %437 = vmatpush1.msra.mxu0 0.0
        %438 = vmatprep.subr.mxu0 0.0
        %439 = vmatpush1.msra.mxu0 0.0
        %440 = vmatprep.subr.mxu0 0.0
        %441 = vmatpush1.msra.mxu0 0.0
        %442 = vmatprep.subr.mxu0 0.0
        %443 = vmatpush1.msra.mxu0 0.0
        %444 = vmatprep.subr.mxu0 0.0
        %445 = vmatpush1.msra.mxu0 0.0
        %446 = vmatprep.subr.mxu0 0.0
        %447 = vmatpush1.msra.mxu0 0.0
        %448 = vmatprep.subr.mxu0 0.0
        %449 = vmatpush1.msra.mxu0 0.0
        %450 = vmatprep.subr.mxu0 0.0
        %451 = vmatpush1.msra.mxu0 0.0
        %452 = vmatprep.subr.mxu0 0.0
        %453 = vmatpush1.msra.mxu0 0.0
        %454 = vmatprep.subr.mxu0 0.0
        %455 = vmatpush1.msra.mxu0 0.0
        %456 = vmatprep.subr.mxu0 0.0
        %457 = vmatpush1.msra.mxu0 0.0
        %458 = vmatprep.subr.mxu0 0.0
        %459 = vmatpush1.msra.mxu0 0.0
        %460 = vmatprep.subr.mxu0 0.0
        %461 = vmatpush1.msra.mxu0 0.0
        %462 = vmatprep.subr.mxu0 0.0
        %463 = vmatpush1.msra.mxu0 0.0
        %464 = vmatprep.subr.mxu0 0.0
        %465 = vmatpush1.msra.mxu0 0.0
        %466 = vmatprep.subr.mxu0 0.0
        %467 = vmatpush1.msra.mxu0 0.0
        %468 = vmatprep.subr.mxu0 0.0
        %469 = vmatpush1.msra.mxu0 0.0
        %470 = vmatprep.subr.mxu0 0.0
        %471 = vmatpush1.msra.mxu0 0.0
        %472 = vmatprep.mubr.f32.mxu0 0.0
        %473 = vmatmul.mubr.f32.gmra.mrb[0].mxu0 %v317
        %v474 = vpop.f32.mrb[0].mxu0
        %v475 = vadd.f32 %v290, %v474
        %v476 = vpop.f32.mrb[0].mxu0
        %v477 = vadd.f32 %v290, %v476
        %478 = vmatprep.mubr.f32.mxu0 0.0
        %479 = vmatmul.mubr.f32.gmra.mrb[0].mxu0 %v320
        %v480 = vpop.f32.mrb[0].mxu0
        %v481 = vadd.f32 %v295, %v480
        %v482 = vpop.f32.mrb[0].mxu0
        %v483 = vadd.f32 %v295, %v482
        %484 = vdwg.mxu0
        %v485 = vmax.f32 %v398, 0.0
        %v486 = vmax.f32 %v400, 0.0
        %v487 = vmax.f32 %v475, 0.0
        %v488 = vmax.f32 %v477, 0.0
        %v489 = vmax.f32 %v404, 0.0
        %v490 = vmax.f32 %v406, 0.0
        %v491 = vmax.f32 %v481, 0.0
        %v492 = vmax.f32 %v483, 0.0
        %v493 = vld [vmem:[%s3] sm:$0xff]
        %v494 = vld [vmem:[%s3 + $0x8] sm:$0x3]
        %v495 = vld [vmem:[%s4] sm:$0xff]
        %v496 = vld [vmem:[%s4 + $0x8] sm:$0x3]
        %498 = vset.pattern.permute.xlu0 0
        %499 = vperm.xlu0 %498, %v495
        %v500 = vpop.permute.xlu0 %499
        %503 = vset.pattern.permute.xlu0 0
        %504 = vperm.xlu0 %503, %v496
        %v505 = vpop.permute.xlu0 %504
        %vm507 = vcmask 80896
        %v509 = vsel %vm507, %v493, 0
        %v512 = vsel %vm507, %v494, 0
        %v515 = vsel %vm322, %v489, 0
        %v518 = vsel %vm322, %v490, 0
        %v521 = vsel %vm322, %v491, 0
        %v524 = vsel %vm322, %v492, 0
        %526 = vmatprep.subr.mxu0 %v486
        %527 = vmatpush1.msra.mxu0 %v485
        %528 = vmatprep.subr.mxu0 %v518
        %529 = vmatpush1.msra.mxu0 %v515
        %530 = vmatprep.subr.mxu0 0.0
        %531 = vmatpush1.msra.mxu0 0.0
        %532 = vmatprep.subr.mxu0 0.0
        %533 = vmatpush1.msra.mxu0 0.0
        %534 = vmatprep.subr.mxu0 0.0
        %535 = vmatpush1.msra.mxu0 0.0
        %536 = vmatprep.subr.mxu0 0.0
        %537 = vmatpush1.msra.mxu0 0.0
        %538 = vmatprep.subr.mxu0 0.0
        %539 = vmatpush1.msra.mxu0 0.0
        %540 = vmatprep.subr.mxu0 0.0
        %541 = vmatpush1.msra.mxu0 0.0
        %542 = vmatprep.subr.mxu0 0.0
        %543 = vmatpush1.msra.mxu0 0.0
        %544 = vmatprep.subr.mxu0 0.0
        %545 = vmatpush1.msra.mxu0 0.0
        %546 = vmatprep.subr.mxu0 0.0
        %547 = vmatpush1.msra.mxu0 0.0
        %548 = vmatprep.subr.mxu0 0.0
        %549 = vmatpush1.msra.mxu0 0.0
        %550 = vmatprep.subr.mxu0 0.0
        %551 = vmatpush1.msra.mxu0 0.0
        %552 = vmatprep.subr.mxu0 0.0
        %553 = vmatpush1.msra.mxu0 0.0
        %554 = vmatprep.subr.mxu0 0.0
        %555 = vmatpush1.msra.mxu0 0.0
        %556 = vmatprep.subr.mxu0 0.0
        %557 = vmatpush1.msra.mxu0 0.0
        %558 = vmatprep.subr.mxu0 0.0
        %559 = vmatpush1.msra.mxu0 0.0
        %560 = vmatprep.subr.mxu0 0.0
        %561 = vmatpush1.msra.mxu0 0.0
        %562 = vmatprep.subr.mxu0 0.0
        %563 = vmatpush1.msra.mxu0 0.0
        %564 = vmatprep.subr.mxu0 0.0
        %565 = vmatpush1.msra.mxu0 0.0
        %566 = vmatprep.subr.mxu0 0.0
        %567 = vmatpush1.msra.mxu0 0.0
        %568 = vmatprep.subr.mxu0 0.0
        %569 = vmatpush1.msra.mxu0 0.0
        %570 = vmatprep.subr.mxu0 0.0
        %571 = vmatpush1.msra.mxu0 0.0
        %572 = vmatprep.subr.mxu0 0.0
        %573 = vmatpush1.msra.mxu0 0.0
        %574 = vmatprep.subr.mxu0 0.0
        %575 = vmatpush1.msra.mxu0 0.0
        %576 = vmatprep.subr.mxu0 0.0
        %577 = vmatpush1.msra.mxu0 0.0
        %578 = vmatprep.subr.mxu0 0.0
        %579 = vmatpush1.msra.mxu0 0.0
        %580 = vmatprep.subr.mxu0 0.0
        %581 = vmatpush1.msra.mxu0 0.0
        %582 = vmatprep.subr.mxu0 0.0
        %583 = vmatpush1.msra.mxu0 0.0
        %584 = vmatprep.subr.mxu0 0.0
        %585 = vmatpush1.msra.mxu0 0.0
        %586 = vmatprep.subr.mxu0 0.0
        %587 = vmatpush1.msra.mxu0 0.0
        %588 = vmatprep.subr.mxu0 0.0
        %589 = vmatpush1.msra.mxu0 0.0
        %590 = vmatprep.mubr.f32.mxu0 0.0
        %591 = vmatmul.mubr.f32.gmra.mrb[0].mxu0 %v509
        %v592 = vpop.f32.mrb[0].mxu0
        %v593 = vadd.f32 %v500, %v592
        %v594 = vpop.f32.mrb[0].mxu0
        %v595 = vadd.f32 %v500, %v594
        %596 = vmatprep.mubr.f32.mxu0 0.0
        %597 = vmatmul.mubr.f32.gmra.mrb[0].mxu0 %v512
        %v598 = vpop.f32.mrb[0].mxu0
        %v599 = vadd.f32 %v505, %v598
        %v600 = vpop.f32.mrb[0].mxu0
        %v601 = vadd.f32 %v505, %v600
        %602 = vdwg.mxu0
        %603 = vmatprep.subr.mxu0 %v488
        %604 = vmatpush1.msra.mxu0 %v487
        %605 = vmatprep.subr.mxu0 %v524
        %606 = vmatpush1.msra.mxu0 %v521
        %607 = vmatprep.subr.mxu0 0.0
        %608 = vmatpush1.msra.mxu0 0.0
        %609 = vmatprep.subr.mxu0 0.0
        %610 = vmatpush1.msra.mxu0 0.0
        %611 = vmatprep.subr.mxu0 0.0
        %612 = vmatpush1.msra.mxu0 0.0
        %613 = vmatprep.subr.mxu0 0.0
        %614 = vmatpush1.msra.mxu0 0.0
        %615 = vmatprep.subr.mxu0 0.0
        %616 = vmatpush1.msra.mxu0 0.0
        %617 = vmatprep.subr.mxu0 0.0
        %618 = vmatpush1.msra.mxu0 0.0
        %619 = vmatprep.subr.mxu0 0.0
        %620 = vmatpush1.msra.mxu0 0.0
        %621 = vmatprep.subr.mxu0 0.0
        %622 = vmatpush1.msra.mxu0 0.0
        %623 = vmatprep.subr.mxu0 0.0
        %624 = vmatpush1.msra.mxu0 0.0
        %625 = vmatprep.subr.mxu0 0.0
        %626 = vmatpush1.msra.mxu0 0.0
        %627 = vmatprep.subr.mxu0 0.0
        %628 = vmatpush1.msra.mxu0 0.0
        %629 = vmatprep.subr.mxu0 0.0
        %630 = vmatpush1.msra.mxu0 0.0
        %631 = vmatprep.subr.mxu0 0.0
        %632 = vmatpush1.msra.mxu0 0.0
        %633 = vmatprep.subr.mxu0 0.0
        %634 = vmatpush1.msra.mxu0 0.0
        %635 = vmatprep.subr.mxu0 0.0
        %636 = vmatpush1.msra.mxu0 0.0
        %637 = vmatprep.subr.mxu0 0.0
        %638 = vmatpush1.msra.mxu0 0.0
        %639 = vmatprep.subr.mxu0 0.0
        %640 = vmatpush1.msra.mxu0 0.0
        %641 = vmatprep.subr.mxu0 0.0
        %642 = vmatpush1.msra.mxu0 0.0
        %643 = vmatprep.subr.mxu0 0.0
        %644 = vmatpush1.msra.mxu0 0.0
        %645 = vmatprep.subr.mxu0 0.0
        %646 = vmatpush1.msra.mxu0 0.0
        %647 = vmatprep.subr.mxu0 0.0
        %648 = vmatpush1.msra.mxu0 0.0
        %649 = vmatprep.subr.mxu0 0.0
        %650 = vmatpush1.msra.mxu0 0.0
        %651 = vmatprep.subr.mxu0 0.0
        %652 = vmatpush1.msra.mxu0 0.0
        %653 = vmatprep.subr.mxu0 0.0
        %654 = vmatpush1.msra.mxu0 0.0
        %655 = vmatprep.subr.mxu0 0.0
        %656 = vmatpush1.msra.mxu0 0.0
        %657 = vmatprep.subr.mxu0 0.0
        %658 = vmatpush1.msra.mxu0 0.0
        %659 = vmatprep.subr.mxu0 0.0
        %660 = vmatpush1.msra.mxu0 0.0
        %661 = vmatprep.subr.mxu0 0.0
        %662 = vmatpush1.msra.mxu0 0.0
        %663 = vmatprep.subr.mxu0 0.0
        %664 = vmatpush1.msra.mxu0 0.0
        %665 = vmatprep.subr.mxu0 0.0
        %666 = vmatpush1.msra.mxu0 0.0
        %667 = vmatprep.mubr.f32.mxu0 0.0
        %668 = vmatmul.mubr.f32.gmra.mrb[0].mxu0 %v509
        %v669 = vpop.f32.mrb[0].mxu0
        %v670 = vadd.f32 %v500, %v669
        %v671 = vpop.f32.mrb[0].mxu0
        %v672 = vadd.f32 %v500, %v671
        %673 = vmatprep.mubr.f32.mxu0 0.0
        %674 = vmatmul.mubr.f32.gmra.mrb[0].mxu0 %v512
        %v675 = vpop.f32.mrb[0].mxu0
        %v676 = vadd.f32 %v505, %v675
        %v677 = vpop.f32.mrb[0].mxu0
        %v678 = vadd.f32 %v505, %v677
        %679 = vdwg.mxu0
        %v680 = vmax.f32 %v593, 0.0
        %v681 = vmax.f32 %v595, 0.0
        %v682 = vmax.f32 %v670, 0.0
        %v683 = vmax.f32 %v672, 0.0
        %v684 = vmax.f32 %v599, 0.0
        %v685 = vmax.f32 %v601, 0.0
        %v686 = vmax.f32 %v676, 0.0
        %v687 = vmax.f32 %v678, 0.0
        %v688 = vld [vmem:[%s5] sm:$0x1]
        %v689 = vld [vmem:[#allocation2] sm:$0x1]
        %691 = vset.pattern.permute.xlu0 0
        %692 = vperm.xlu0 %691, %v689
        %v693 = vpop.permute.xlu0 %692
        %v695 = vlaneseq
        %v696 = vshrl.u32 %v695, 7
        %v697 = vsub.s32 0, %v696
        %v698 = vrot.slane %v693, %v697
        %v700 = vsel %vm507, %v688, 0
        %v703 = vsel %vm322, %v684, 0
        %v706 = vsel %vm322, %v685, 0
        %v709 = vsel %vm322, %v686, 0
        %v712 = vsel %vm322, %v687, 0
        %714 = vmatprep.subr.mxu0 %v681
        %715 = vmatpush1.msra.mxu0 %v680
        %716 = vmatprep.subr.mxu0 %v706
        %717 = vmatpush1.msra.mxu0 %v703
        %718 = vmatprep.subr.mxu0 0.0
        %719 = vmatpush1.msra.mxu0 0.0
        %720 = vmatprep.subr.mxu0 0.0
        %721 = vmatpush1.msra.mxu0 0.0
        %722 = vmatprep.subr.mxu0 0.0
        %723 = vmatpush1.msra.mxu0 0.0
        %724 = vmatprep.subr.mxu0 0.0
        %725 = vmatpush1.msra.mxu0 0.0
        %726 = vmatprep.subr.mxu0 0.0
        %727 = vmatpush1.msra.mxu0 0.0
        %728 = vmatprep.subr.mxu0 0.0
        %729 = vmatpush1.msra.mxu0 0.0
        %730 = vmatprep.subr.mxu0 0.0
        %731 = vmatpush1.msra.mxu0 0.0
        %732 = vmatprep.subr.mxu0 0.0
        %733 = vmatpush1.msra.mxu0 0.0
        %734 = vmatprep.subr.mxu0 0.0
        %735 = vmatpush1.msra.mxu0 0.0
        %736 = vmatprep.subr.mxu0 0.0
        %737 = vmatpush1.msra.mxu0 0.0
        %738 = vmatprep.subr.mxu0 0.0
        %739 = vmatpush1.msra.mxu0 0.0
        %740 = vmatprep.subr.mxu0 0.0
        %741 = vmatpush1.msra.mxu0 0.0
        %742 = vmatprep.subr.mxu0 0.0
        %743 = vmatpush1.msra.mxu0 0.0
        %744 = vmatprep.subr.mxu0 0.0
        %745 = vmatpush1.msra.mxu0 0.0
        %746 = vmatprep.subr.mxu0 0.0
        %747 = vmatpush1.msra.mxu0 0.0
        %748 = vmatprep.subr.mxu0 0.0
        %749 = vmatpush1.msra.mxu0 0.0
        %750 = vmatprep.subr.mxu0 0.0
        %751 = vmatpush1.msra.mxu0 0.0
        %752 = vmatprep.subr.mxu0 0.0
        %753 = vmatpush1.msra.mxu0 0.0
        %754 = vmatprep.subr.mxu0 0.0
        %755 = vmatpush1.msra.mxu0 0.0
        %756 = vmatprep.subr.mxu0 0.0
        %757 = vmatpush1.msra.mxu0 0.0
        %758 = vmatprep.subr.mxu0 0.0
        %759 = vmatpush1.msra.mxu0 0.0
        %760 = vmatprep.subr.mxu0 0.0
        %761 = vmatpush1.msra.mxu0 0.0
        %762 = vmatprep.subr.mxu0 0.0
        %763 = vmatpush1.msra.mxu0 0.0
        %764 = vmatprep.subr.mxu0 0.0
        %765 = vmatpush1.msra.mxu0 0.0
        %766 = vmatprep.subr.mxu0 0.0
        %767 = vmatpush1.msra.mxu0 0.0
        %768 = vmatprep.subr.mxu0 0.0
        %769 = vmatpush1.msra.mxu0 0.0
        %770 = vmatprep.subr.mxu0 0.0
        %771 = vmatpush1.msra.mxu0 0.0
        %772 = vmatprep.subr.mxu0 0.0
        %773 = vmatpush1.msra.mxu0 0.0
        %774 = vmatprep.subr.mxu0 0.0
        %775 = vmatpush1.msra.mxu0 0.0
        %776 = vmatprep.subr.mxu0 0.0
        %777 = vmatpush1.msra.mxu0 0.0
        %778 = vmatprep.mubr.f32.mxu0 0.0
        %779 = vmatmul.mubr.f32.gmra.mrb[0].mxu0 %v700
        %v780 = vpop.f32.mrb[0].mxu0
        %v781 = vadd.f32 %v698, %v780
        %v782 = vpop.f32.mrb[0].mxu0
        %v783 = vadd.f32 %v698, %v782
        %784 = vdwg.mxu0
        %785 = vmatprep.subr.mxu0 %v683
        %786 = vmatpush1.msra.mxu0 %v682
        %787 = vmatprep.subr.mxu0 %v712
        %788 = vmatpush1.msra.mxu0 %v709
        %789 = vmatprep.subr.mxu0 0.0
        %790 = vmatpush1.msra.mxu0 0.0
        %791 = vmatprep.subr.mxu0 0.0
        %792 = vmatpush1.msra.mxu0 0.0
        %793 = vmatprep.subr.mxu0 0.0
        %794 = vmatpush1.msra.mxu0 0.0
        %795 = vmatprep.subr.mxu0 0.0
        %796 = vmatpush1.msra.mxu0 0.0
        %797 = vmatprep.subr.mxu0 0.0
        %798 = vmatpush1.msra.mxu0 0.0
        %799 = vmatprep.subr.mxu0 0.0
        %800 = vmatpush1.msra.mxu0 0.0
        %801 = vmatprep.subr.mxu0 0.0
        %802 = vmatpush1.msra.mxu0 0.0
        %803 = vmatprep.subr.mxu0 0.0
        %804 = vmatpush1.msra.mxu0 0.0
        %805 = vmatprep.subr.mxu0 0.0
        %806 = vmatpush1.msra.mxu0 0.0
        %807 = vmatprep.subr.mxu0 0.0
        %808 = vmatpush1.msra.mxu0 0.0
        %809 = vmatprep.subr.mxu0 0.0
        %810 = vmatpush1.msra.mxu0 0.0
        %811 = vmatprep.subr.mxu0 0.0
        %812 = vmatpush1.msra.mxu0 0.0
        %813 = vmatprep.subr.mxu0 0.0
        %814 = vmatpush1.msra.mxu0 0.0
        %815 = vmatprep.subr.mxu0 0.0
        %816 = vmatpush1.msra.mxu0 0.0
        %817 = vmatprep.subr.mxu0 0.0
        %818 = vmatpush1.msra.mxu0 0.0
        %819 = vmatprep.subr.mxu0 0.0
        %820 = vmatpush1.msra.mxu0 0.0
        %821 = vmatprep.subr.mxu0 0.0
        %822 = vmatpush1.msra.mxu0 0.0
        %823 = vmatprep.subr.mxu0 0.0
        %824 = vmatpush1.msra.mxu0 0.0
        %825 = vmatprep.subr.mxu0 0.0
        %826 = vmatpush1.msra.mxu0 0.0
        %827 = vmatprep.subr.mxu0 0.0
        %828 = vmatpush1.msra.mxu0 0.0
        %829 = vmatprep.subr.mxu0 0.0
        %830 = vmatpush1.msra.mxu0 0.0
        %831 = vmatprep.subr.mxu0 0.0
        %832 = vmatpush1.msra.mxu0 0.0
        %833 = vmatprep.subr.mxu0 0.0
        %834 = vmatpush1.msra.mxu0 0.0
        %835 = vmatprep.subr.mxu0 0.0
        %836 = vmatpush1.msra.mxu0 0.0
        %837 = vmatprep.subr.mxu0 0.0
        %838 = vmatpush1.msra.mxu0 0.0
        %839 = vmatprep.subr.mxu0 0.0
        %840 = vmatpush1.msra.mxu0 0.0
        %841 = vmatprep.subr.mxu0 0.0
        %842 = vmatpush1.msra.mxu0 0.0
        %843 = vmatprep.subr.mxu0 0.0
        %844 = vmatpush1.msra.mxu0 0.0
        %845 = vmatprep.subr.mxu0 0.0
        %846 = vmatpush1.msra.mxu0 0.0
        %847 = vmatprep.subr.mxu0 0.0
        %848 = vmatpush1.msra.mxu0 0.0
        %849 = vmatprep.mubr.f32.mxu0 0.0
        %850 = vmatmul.mubr.f32.gmra.mrb[0].mxu0 %v700
        %v851 = vpop.f32.mrb[0].mxu0
        %v852 = vadd.f32 %v698, %v851
        %v853 = vpop.f32.mrb[0].mxu0
        %v854 = vadd.f32 %v698, %v853
        %855 = vdwg.mxu0
        %v860 = vcombine.low %v781, %v783
        %v861 = vcombine.low %v852, %v854
        %v863 = vunpack.c.l.s4 1966171168
        %v864 = vunpack.c.0.s8 %v863
        %v865 = vlaneseq
        %v866 = vshrl.u32 %v865, 7
        %v867 = vsub.s32 %v864, %v866
        %v868 = vrot.slane %v860, %v867
        %v870 = vunpack.c.l.s4 1966171168
        %v871 = vunpack.c.0.s8 %v870
        %v872 = vlaneseq
        %v873 = vshrl.u32 %v872, 7
        %v874 = vsub.s32 %v871, %v873
        %v875 = vrot.slane %v861, %v874
        %v876 = vcombine.low %v868, %v875
        %v878 = vunpack.c.l.s4 1966171168
        %v879 = vunpack.c.0.s8 %v878
        %v880 = vlaneseq
        %v881 = vshrl.u32 %v880, 7
        %v882 = vsub.s32 %v879, %v881
        %v883 = vrot.slane %v876, %v882
        %v885 = vlaneseq
        %vm886 = vcmp.ge.s32.totalorder %v885, 0
        %vm887 = vcmp.lt.s32.totalorder %v885, 512
        %vm888 = vmand %vm886, %vm887
        %889 = vst.msk [vmem:[%s274] sm:$0xf] %vm888, %v883
        %s890 = sand.u32 %s183, 1
        %s891 = scalar_lea.sflag [#allocation4], %s890
        %s892 = sand.u32 %s183, 1
        %s893 = smul.addr %s892, 4
        %s894 = scalar_lea.vmem [#allocation3], %s893
        // Predicated region
        $region49: #{circle_model_v2.1} parent=47 // pred_check
          %p895 = pneg %p193
        $region50: #{circle_model_v2.1} parent=47 // pred_check_branch
          %897 = sbr.rel (%p895) target = $region52
        $region51: #{circle_model_v2.1} parent=47 // pred_region
          %s898 = smul.u32 4, %s23
          %s900 = ssub.s32 64, 64
          %901 = vsyncadd %s891, %s900
          %s902 = smul.addr %s898, 16
          %s903 = scalar_lea.hbm %s7, %s902
          %s905 = sshll.u32 %s894, 4
          %s906 = int_to_ptr.vmem [resolvable:$true] %s905
          %908 = dma.vmem_to_hbm [thread:$0]  %s906, 64, %s903, %s891
        $region52: #{circle_model_v2.1} parent=47 // pred_fallthru
          _
      $region48: #{circle_model_v2.1} parent=5 // pred_fallthru
        _
      %p909 = scmp.le.s32.totalorder 2, %s18
      // Predicated region
      $region53: #{circle_model_v2.1} parent=5 // pred_check
        %p910 = pneg %p909
      $region54: #{circle_model_v2.1} parent=5 // pred_check_branch
        %912 = sbr.rel (%p910) target = $region56
      $region55: #{circle_model_v2.1} parent=5 // pred_region
        %s913 = ssub.s32 %s18, 2
        // Predicated region
        $region57: #{circle_model_v2.1} parent=55 // pred_check
          %p914 = pneg %p199
        $region58: #{circle_model_v2.1} parent=55 // pred_check_branch
          %916 = sbr.rel (%p914) target = $region60
        $region59: #{circle_model_v2.1} parent=55 // pred_region
          %s917 = sand.u32 %s184, 1
          %s918 = scalar_lea.sflag [#allocation4], %s917
          %s919 = sand.u32 %s184, 1
          %s920 = smul.addr %s919, 4
          %s921 = scalar_lea.vmem [#allocation3], %s920
          %922 = dma.done %s918, 64
        $region60: #{circle_model_v2.1} parent=55 // pred_fallthru
          _
      $region56: #{circle_model_v2.1} parent=5 // pred_fallthru
        _
    $region6: #{circle_model_v2.1} parent=1 // loop_footer
      %s22 = sadd.s32 1, %s18
    $region7: #{circle_model_v2.1} parent=1 // loop_footer_branch
      %17 = sbr.rel target = $region3
    $region8: #{circle_model_v2.1} parent=1 // loop_exit
      _
    %923 = vsyncpa [#allocation4], 1
    %s924 = scalar_lea.sflag [#allocation4], 1
    %925 = vsyncpa %s924, 1

</llo_original>
